<compile_context>
chip_gen: v5e
topology: v5e:2x2
jax: 0.10.0
libtpu: 0.0.40
codegen_flags: <defaults>
</compile_context>

<pallas_src>
import functools
import math

import jax
import jax.numpy as jnp
from jax.experimental import pallas as pl
from jax.experimental.pallas import tpu as pltpu


def _round_up(x, m):
    return ((x + m - 1) // m) * m


def _pick_tile(length, max_tile, align):
    if length >= max_tile:
        return max_tile
    return _round_up(length, align)


# -----------------------------------------------------------------------------
# Kernel 1: K/V projections, head-major output (B, H, S, Dh) bf16.
# Runs once per (batch, kv-tile); the attention kernel just consumes the cache.
# -----------------------------------------------------------------------------
def _kv_proj_kernel(enc_ref, wk_ref, bk_ref, wv_ref, bv_ref, k_ref, v_ref, *,
                    num_heads):
    eb = enc_ref[0]                                            # (ts, C) bf16
    for h in range(num_heads):                                 # static unroll
        kh = jnp.dot(eb, wk_ref[h], preferred_element_type=jnp.float32) + bk_ref[h]
        vh = jnp.dot(eb, wv_ref[h], preferred_element_type=jnp.float32) + bv_ref[h]
        k_ref[0, h] = kh.astype(jnp.bfloat16)
        v_ref[0, h] = vh.astype(jnp.bfloat16)


# -----------------------------------------------------------------------------
# Kernel 2: fused cross-attention for one (batch, q-tile) grid cell with an
# online-softmax (flash) loop over the kv-tile grid axis.
# -----------------------------------------------------------------------------
def _mhca_kernel(x_ref, k_ref, v_ref, wq_ref, bq_ref, wo_ref, bo_ref, o_ref,
                 q_sc, m_sc, l_sc, acc_sc, *,
                 num_heads, head_dim, kv_tile, kv_len, masked):
    s_idx = pl.program_id(2)
    tq = x_ref.shape[1]

    @pl.when(s_idx == 0)
    def _init():
        scale = 1.0 / math.sqrt(head_dim)
        xb = x_ref[0]                                          # (tq, C) bf16
        for h in range(num_heads):
            qh = jnp.dot(xb, wq_ref[h],
                         preferred_element_type=jnp.float32) + bq_ref[h]
            q_sc[h] = (qh * scale).astype(jnp.bfloat16)        # fold 1/sqrt(Dh)
        m_sc[...] = jnp.full_like(m_sc, -jnp.inf)
        l_sc[...] = jnp.zeros_like(l_sc)
        acc_sc[...] = jnp.zeros_like(acc_sc)

    if masked:  # static: only traced when S was padded to a kv-tile multiple
        col = s_idx * kv_tile + jax.lax.broadcasted_iota(
            jnp.int32, (tq, kv_tile), 1)
        kv_valid = col < kv_len

    for h in range(num_heads):                                 # static unroll
        qh = q_sc[h]                                           # (tq, Dh) bf16
        kh = k_ref[0, h]                                       # (ts, Dh) bf16
        vh = v_ref[0, h]                                       # (ts, Dh) bf16
        s = jax.lax.dot_general(qh, kh, (((1,), (1,)), ((), ())),
                                preferred_element_type=jnp.float32)  # (tq, ts)
        if masked:
            s = jnp.where(kv_valid, s, -jnp.inf)
        m_prev = m_sc[h]                                       # (tq, 1) f32
        m_new = jnp.maximum(m_prev, jnp.max(s, axis=-1, keepdims=True))
        alpha = jnp.exp(m_prev - m_new)
        p = jnp.exp(s - m_new)                                 # f32 (v5e-safe)
        l_sc[h] = alpha * l_sc[h] + jnp.sum(p, axis=-1, keepdims=True)
        acc_sc[h] = alpha * acc_sc[h] + jnp.dot(
            p.astype(jnp.bfloat16), vh, preferred_element_type=jnp.float32)
        m_sc[h] = m_new

    @pl.when(s_idx == pl.num_programs(2) - 1)
    def _finalize():
        parts = []
        for h in range(num_heads):
            inv_l = pl.reciprocal(l_sc[h], approx=True)        # EUP slot
            parts.append((acc_sc[h] * inv_l).astype(jnp.bfloat16))
        av = jnp.concatenate(parts, axis=-1)                   # (tq, d_model)
        out = jnp.dot(av, wo_ref[...],                         # one K=d_model dot
                      preferred_element_type=jnp.float32) + bo_ref[...]
        o_ref[0] = out.astype(o_ref.dtype)
    # TODO(synk): training-mode Dropout (on softmax weights and on the output)
    # is identity in eval mode and is not implemented here.


# -----------------------------------------------------------------------------
# pallas_call wrapper
# -----------------------------------------------------------------------------
def multi_head_cross_attention(x, encoder_out, params, *,
                               max_q_tile=256,   # raise to 512 on v6e if T allows
                               max_kv_tile=512):
    """x: (B, T, C) f32; encoder_out: (B, S, C) f32 -> (B, T, C) f32."""
    B, T, C = x.shape
    S = encoder_out.shape[1]
    num_heads, _, head_dim = params["wq"].shape       # (H, C, Dh)
    d_model = num_heads * head_dim

    tq = _pick_tile(T, max_q_tile, 16)                # bf16 sublane packing
    ts = _pick_tile(S, max_kv_tile, 16)
    t_pad = _round_up(T, tq)
    s_pad = _round_up(S, ts)
    n_t, n_s = t_pad // tq, s_pad // ts

    # bf16 activations into the kernels (halves HBM->VMEM bytes); f32 output.
    x_b = x.astype(jnp.bfloat16)
    enc_b = encoder_out.astype(jnp.bfloat16)
    if t_pad != T:
        x_b = jnp.pad(x_b, ((0, 0), (0, t_pad - T), (0, 0)))
    if s_pad != S:
        enc_b = jnp.pad(enc_b, ((0, 0), (0, s_pad - S), (0, 0)))

    def wspec2(shape, ndim_grid):
        imap = (lambda b, s: (0,) * len(shape)) if ndim_grid == 2 else \
               (lambda b, t, s: (0,) * len(shape))
        return pl.BlockSpec(shape, imap, pipeline_mode=pl.Buffered(1))

    # --- Pass 1: K/V projection cache (head-major, bf16) --------------------
    kv_shape = jax.ShapeDtypeStruct((B, num_heads, s_pad, head_dim), jnp.bfloat16)
    k_hm, v_hm = pl.pallas_call(
        functools.partial(_kv_proj_kernel, num_heads=num_heads),
        out_shape=(kv_shape, kv_shape),
        grid=(B, n_s),
        in_specs=[
            pl.BlockSpec((1, ts, C), lambda b, s: (b, s, 0)),
            wspec2((num_heads, C, head_dim), 2),   # wk
            wspec2((num_heads, 1, head_dim), 2),   # bk
            wspec2((num_heads, C, head_dim), 2),   # wv
            wspec2((num_heads, 1, head_dim), 2),   # bv
        ],
        out_specs=(
            pl.BlockSpec((1, num_heads, ts, head_dim), lambda b, s: (b, 0, s, 0)),
            pl.BlockSpec((1, num_heads, ts, head_dim), lambda b, s: (b, 0, s, 0)),
        ),
        compiler_params=pltpu.CompilerParams(
            dimension_semantics=("parallel", "parallel")),
    )(enc_b, params["wk"], params["bk"], params["wv"], params["bv"])

    # --- VMEM budget for the attention pass (inputs double-buffered except
    #     the single-buffered weights; scratch counted once) -----------------
    def pb(shape, itemsize):
        s = list(shape)
        s[-1] = _round_up(s[-1], 128)
        if len(s) >= 2:
            s[-2] = _round_up(s[-2], 8)
        n = 1
        for d in s:
            n *= d
        return n * itemsize

    H, Dh = num_heads, head_dim
    est = (2 * pb((1, tq, C), 2)
           + 2 * 2 * pb((1, H, ts, Dh), 2)
           + pb((H, C, Dh), 2) + pb((H, 1, Dh), 4)
           + pb((d_model, C), 2) + pb((1, C), 4)
           + 2 * pb((1, tq, C), 4)
           + pb((H, tq, Dh), 2) + 2 * pb((H, tq, 1), 4) + pb((H, tq, Dh), 4))
    try:
        vmem_cap = pltpu.get_tpu_info().vmem_capacity_bytes
    except Exception:
        vmem_cap = 64 * 1024 * 1024   # conservative (v7x per-core)
    vmem_limit = int(min(vmem_cap - (8 << 20), max(32 << 20, 2 * est + (4 << 20))))

    # --- Pass 2: fused attention --------------------------------------------
    out = pl.pallas_call(
        functools.partial(_mhca_kernel, num_heads=num_heads, head_dim=head_dim,
                          kv_tile=ts, kv_len=S, masked=(s_pad != S)),
        out_shape=jax.ShapeDtypeStruct((B, t_pad, C), jnp.float32),
        grid=(B, n_t, n_s),
        in_specs=[
            pl.BlockSpec((1, tq, C), lambda b, t, s: (b, t, 0)),                  # x
            pl.BlockSpec((1, num_heads, ts, head_dim), lambda b, t, s: (b, 0, s, 0)),  # K
            pl.BlockSpec((1, num_heads, ts, head_dim), lambda b, t, s: (b, 0, s, 0)),  # V
            wspec2((num_heads, C, head_dim), 3),   # wq
            wspec2((num_heads, 1, head_dim), 3),   # bq
            wspec2((d_model, C), 3),               # wo
            wspec2((1, C), 3),                     # bo
        ],
        out_specs=pl.BlockSpec((1, tq, C), lambda b, t, s: (b, t, 0)),
        scratch_shapes=[
            pltpu.VMEM((num_heads, tq, head_dim), jnp.bfloat16),   # q cache
            pltpu.VMEM((num_heads, tq, 1), jnp.float32),           # m
            pltpu.VMEM((num_heads, tq, 1), jnp.float32),           # l
            pltpu.VMEM((num_heads, tq, head_dim), jnp.float32),    # acc
        ],
        compiler_params=pltpu.CompilerParams(
            dimension_semantics=("parallel", "parallel", "arbitrary"),
            vmem_limit_bytes=vmem_limit),
    )(x_b, k_hm, v_hm, params["wq"], params["bq"], params["wo"], params["bo"])

    return out[:, :T, :] if t_pad != T else out


# -----------------------------------------------------------------------------
# Parameters (torch nn.Linear-style init), layout conversion, reference
# -----------------------------------------------------------------------------
def init_params(key, *, num_heads, embed_dim, d_model):
    assert d_model % num_heads == 0
    ks = jax.random.split(key, 8)

    def lin(k, fan_in, shape):
        bound = 1.0 / math.sqrt(fan_in)
        return jax.random.uniform(k, shape, jnp.float32, -bound, bound)

    return {
        "wq": lin(ks[0], embed_dim, (embed_dim, d_model)),
        "bq": lin(ks[1], embed_dim, (1, d_model)),
        "wk": lin(ks[2], embed_dim, (embed_dim, d_model)),
        "bk": lin(ks[3], embed_dim, (1, d_model)),
        "wv": lin(ks[4], embed_dim, (embed_dim, d_model)),
        "bv": lin(ks[5], embed_dim, (1, d_model)),
        "wo": lin(ks[6], d_model, (d_model, embed_dim)),
        "bo": lin(ks[7], d_model, (1, embed_dim)),
    }


def to_kernel_params(p_f32, num_heads):
    """Head-major bf16 q/k/v weights; f32 biases; lane-dense wo."""
    C, d_model = p_f32["wq"].shape
    head_dim = d_model // num_heads

    def hm_w(w):   # (C, H*Dh) -> (H, C, Dh) bf16
        return jnp.transpose(w.reshape(C, num_heads, head_dim),
                             (1, 0, 2)).astype(jnp.bfloat16)

    def hm_b(b):   # (1, H*Dh) -> (H, 1, Dh) f32
        return b.reshape(num_heads, 1, head_dim)

    return {
        "wq": hm_w(p_f32["wq"]), "bq": hm_b(p_f32["bq"]),
        "wk": hm_w(p_f32["wk"]), "bk": hm_b(p_f32["bk"]),
        "wv": hm_w(p_f32["wv"]), "bv": hm_b(p_f32["bv"]),
        "wo": p_f32["wo"].astype(jnp.bfloat16), "bo": p_f32["bo"],
    }


def mhca_reference(x, enc, p, num_heads):
    """Pure-JAX f32 reference matching the PyTorch module (eval mode)."""
    q = x @ p["wq"] + p["bq"]
    k = enc @ p["wk"] + p["bk"]
    v = enc @ p["wv"] + p["bv"]
    d_model = q.shape[-1]
    head_dim = d_model // num_heads
    outs = []
    for h in range(num_heads):
        sl = slice(h * head_dim, (h + 1) * head_dim)
        s = jnp.einsum("btd,bsd->bts", q[..., sl], k[..., sl]) / math.sqrt(head_dim)
        w = jax.nn.softmax(s, axis=-1)
        outs.append(jnp.einsum("bts,bsd->btd", w, v[..., sl]))
    cat = jnp.concatenate(outs, axis=-1)
    return cat @ p["wo"] + p["bo"]


# -----------------------------------------------------------------------------
# Demo (small shapes; production C/d_model should be multiples of 128)
# -----------------------------------------------------------------------------
if __name__ == "__main__":
    num_heads = 4
    embed_dim = 32     # C
    d_model = 64       # H * Dh  (head_dim = 16)
    B, T, S = 2, 8, 16

    key = jax.random.PRNGKey(0)
    kx, ke, kp = jax.random.split(key, 3)

    x = jax.random.normal(kx, (B, T, embed_dim), dtype=jnp.float32)
    encoder_out = jax.random.normal(ke, (B, S, embed_dim), dtype=jnp.float32)

    params_f32 = init_params(kp, num_heads=num_heads,
                             embed_dim=embed_dim, d_model=d_model)
    kparams = to_kernel_params(params_f32, num_heads)

    out = multi_head_cross_attention(x, encoder_out, kparams)
    out = jax.block_until_ready(out)

    assert out.shape == (B, T, embed_dim), out.shape
    assert out.dtype == jnp.float32

    ref = mhca_reference(x, encoder_out, params_f32, num_heads)
    max_err = float(jnp.max(jnp.abs(out - ref)))
    assert jnp.allclose(out, ref, atol=5e-2, rtol=5e-2), max_err

    print("KERNEL_OK")
</pallas_src>

<mosaic_0001>
module attributes {stable_mosaic.version = 11 : i64} {
  func.func @_kv_proj_kernel(%arg0: i32, %arg1: i32, %arg2: memref<1x16x32xbf16, #tpu.memory_space<vmem>>, %arg3: memref<4x32x16xbf16, #tpu.memory_space<vmem>>, %arg4: memref<4x1x16xf32, #tpu.memory_space<vmem>>, %arg5: memref<4x32x16xbf16, #tpu.memory_space<vmem>>, %arg6: memref<4x1x16xf32, #tpu.memory_space<vmem>>, %arg7: memref<1x4x16x16xbf16, #tpu.memory_space<vmem>>, %arg8: memref<1x4x16x16xbf16, #tpu.memory_space<vmem>>) attributes {dimension_semantics = [#tpu.dimension_semantics<parallel>, #tpu.dimension_semantics<parallel>], iteration_bounds = array<i64: 2, 1>, scalar_prefetch = 0 : i64, scratch_operands = 0 : i64, tpu.core_type = #tpu.core_type<tc>, window_params = [{transform_indices = @transform_0, window_bounds = array<i64: 1, 16, 32>}, {pipeline_mode = #tpu.pipeline_mode<synchronous>, transform_indices = @transform_1, window_bounds = array<i64: 4, 32, 16>}, {pipeline_mode = #tpu.pipeline_mode<synchronous>, transform_indices = @transform_2, window_bounds = array<i64: 4, 1, 16>}, {pipeline_mode = #tpu.pipeline_mode<synchronous>, transform_indices = @transform_3, window_bounds = array<i64: 4, 32, 16>}, {pipeline_mode = #tpu.pipeline_mode<synchronous>, transform_indices = @transform_4, window_bounds = array<i64: 4, 1, 16>}, {transform_indices = @transform_5, window_bounds = array<i64: 1, 4, 16, 16>}, {transform_indices = @transform_6, window_bounds = array<i64: 1, 4, 16, 16>}]} {
    %c0 = arith.constant 0 : index
    %c0_0 = arith.constant 0 : index
    %c0_1 = arith.constant 0 : index
    %0 = vector.load %arg2[%c0, %c0_0, %c0_1] : memref<1x16x32xbf16, #tpu.memory_space<vmem>>, vector<1x16x32xbf16>
    %1 = vector.shape_cast %0 : vector<1x16x32xbf16> to vector<16x32xbf16>
    %c0_2 = arith.constant 0 : index
    %c0_3 = arith.constant 0 : index
    %c0_4 = arith.constant 0 : index
    %2 = vector.load %arg3[%c0_2, %c0_3, %c0_4] : memref<4x32x16xbf16, #tpu.memory_space<vmem>>, vector<1x32x16xbf16>
    %3 = vector.shape_cast %2 : vector<1x32x16xbf16> to vector<32x16xbf16>
    %cst = arith.constant dense<0.000000e+00> : vector<16x16xf32>
    %4 = tpu.matmul %1, %3, %cst {dimension_numbers = #tpu.dot_dimension_numbers<[1], [0], [0], [1], [0, 0, 1, 1], [], []>} : vector<16x32xbf16>, vector<32x16xbf16>, vector<16x16xf32> -> vector<16x16xf32>
    %c0_5 = arith.constant 0 : index
    %c0_6 = arith.constant 0 : index
    %c0_7 = arith.constant 0 : index
    %5 = vector.load %arg4[%c0_5, %c0_6, %c0_7] : memref<4x1x16xf32, #tpu.memory_space<vmem>>, vector<1x1x16xf32>
    %6 = vector.shape_cast %5 : vector<1x1x16xf32> to vector<1x16xf32>
    %7 = vector.broadcast %6 : vector<1x16xf32> to vector<16x16xf32>
    %8 = arith.addf %4, %7 : vector<16x16xf32>
    %c0_8 = arith.constant 0 : index
    %c0_9 = arith.constant 0 : index
    %c0_10 = arith.constant 0 : index
    %9 = vector.load %arg5[%c0_8, %c0_9, %c0_10] : memref<4x32x16xbf16, #tpu.memory_space<vmem>>, vector<1x32x16xbf16>
    %10 = vector.shape_cast %9 : vector<1x32x16xbf16> to vector<32x16xbf16>
    %cst_11 = arith.constant dense<0.000000e+00> : vector<16x16xf32>
    %11 = tpu.matmul %1, %10, %cst_11 {dimension_numbers = #tpu.dot_dimension_numbers<[1], [0], [0], [1], [0, 0, 1, 1], [], []>} : vector<16x32xbf16>, vector<32x16xbf16>, vector<16x16xf32> -> vector<16x16xf32>
    %c0_12 = arith.constant 0 : index
    %c0_13 = arith.constant 0 : index
    %c0_14 = arith.constant 0 : index
    %12 = vector.load %arg6[%c0_12, %c0_13, %c0_14] : memref<4x1x16xf32, #tpu.memory_space<vmem>>, vector<1x1x16xf32>
    %13 = vector.shape_cast %12 : vector<1x1x16xf32> to vector<1x16xf32>
    %14 = vector.broadcast %13 : vector<1x16xf32> to vector<16x16xf32>
    %15 = arith.addf %11, %14 : vector<16x16xf32>
    %16 = arith.truncf %8 : vector<16x16xf32> to vector<16x16xbf16>
    %c0_15 = arith.constant 0 : index
    %c0_16 = arith.constant 0 : index
    %c0_17 = arith.constant 0 : index
    %c0_18 = arith.constant 0 : index
    %17 = vector.load %arg7[%c0_15, %c0_16, %c0_17, %c0_18] : memref<1x4x16x16xbf16, #tpu.memory_space<vmem>>, vector<1x1x16x16xbf16>
    %18 = vector.shape_cast %17 : vector<1x1x16x16xbf16> to vector<16x16xbf16>
    %19 = vector.shape_cast %16 : vector<16x16xbf16> to vector<1x1x16x16xbf16>
    tpu.vector_store %arg7[%c0_15, %c0_16, %c0_17, %c0_18], %19 {strides = array<i32>} : memref<1x4x16x16xbf16, #tpu.memory_space<vmem>>, vector<1x1x16x16xbf16>,
    %20 = arith.truncf %15 : vector<16x16xf32> to vector<16x16xbf16>
    %c0_19 = arith.constant 0 : index
    %c0_20 = arith.constant 0 : index
    %c0_21 = arith.constant 0 : index
    %c0_22 = arith.constant 0 : index
    %21 = vector.load %arg8[%c0_19, %c0_20, %c0_21, %c0_22] : memref<1x4x16x16xbf16, #tpu.memory_space<vmem>>, vector<1x1x16x16xbf16>
    %22 = vector.shape_cast %21 : vector<1x1x16x16xbf16> to vector<16x16xbf16>
    %23 = vector.shape_cast %20 : vector<16x16xbf16> to vector<1x1x16x16xbf16>
    tpu.vector_store %arg8[%c0_19, %c0_20, %c0_21, %c0_22], %23 {strides = array<i32>} : memref<1x4x16x16xbf16, #tpu.memory_space<vmem>>, vector<1x1x16x16xbf16>,
    %c1 = arith.constant 1 : index
    %c0_23 = arith.constant 0 : index
    %c0_24 = arith.constant 0 : index
    %24 = vector.load %arg3[%c1, %c0_23, %c0_24] : memref<4x32x16xbf16, #tpu.memory_space<vmem>>, vector<1x32x16xbf16>
    %25 = vector.shape_cast %24 : vector<1x32x16xbf16> to vector<32x16xbf16>
    %cst_25 = arith.constant dense<0.000000e+00> : vector<16x16xf32>
    %26 = tpu.matmul %1, %25, %cst_25 {dimension_numbers = #tpu.dot_dimension_numbers<[1], [0], [0], [1], [0, 0, 1, 1], [], []>} : vector<16x32xbf16>, vector<32x16xbf16>, vector<16x16xf32> -> vector<16x16xf32>
    %c1_26 = arith.constant 1 : index
    %c0_27 = arith.constant 0 : index
    %c0_28 = arith.constant 0 : index
    %27 = vector.load %arg4[%c1_26, %c0_27, %c0_28] : memref<4x1x16xf32, #tpu.memory_space<vmem>>, vector<1x1x16xf32>
    %28 = vector.shape_cast %27 : vector<1x1x16xf32> to vector<1x16xf32>
    %29 = vector.broadcast %28 : vector<1x16xf32> to vector<16x16xf32>
    %30 = arith.addf %26, %29 : vector<16x16xf32>
    %c1_29 = arith.constant 1 : index
    %c0_30 = arith.constant 0 : index
    %c0_31 = arith.constant 0 : index
    %31 = vector.load %arg5[%c1_29, %c0_30, %c0_31] : memref<4x32x16xbf16, #tpu.memory_space<vmem>>, vector<1x32x16xbf16>
    %32 = vector.shape_cast %31 : vector<1x32x16xbf16> to vector<32x16xbf16>
    %cst_32 = arith.constant dense<0.000000e+00> : vector<16x16xf32>
    %33 = tpu.matmul %1, %32, %cst_32 {dimension_numbers = #tpu.dot_dimension_numbers<[1], [0], [0], [1], [0, 0, 1, 1], [], []>} : vector<16x32xbf16>, vector<32x16xbf16>, vector<16x16xf32> -> vector<16x16xf32>
    %c1_33 = arith.constant 1 : index
    %c0_34 = arith.constant 0 : index
    %c0_35 = arith.constant 0 : index
    %34 = vector.load %arg6[%c1_33, %c0_34, %c0_35] : memref<4x1x16xf32, #tpu.memory_space<vmem>>, vector<1x1x16xf32>
    %35 = vector.shape_cast %34 : vector<1x1x16xf32> to vector<1x16xf32>
    %36 = vector.broadcast %35 : vector<1x16xf32> to vector<16x16xf32>
    %37 = arith.addf %33, %36 : vector<16x16xf32>
    %38 = arith.truncf %30 : vector<16x16xf32> to vector<16x16xbf16>
    %c0_36 = arith.constant 0 : index
    %c1_37 = arith.constant 1 : index
    %c0_38 = arith.constant 0 : index
    %c0_39 = arith.constant 0 : index
    %39 = vector.load %arg7[%c0_36, %c1_37, %c0_38, %c0_39] : memref<1x4x16x16xbf16, #tpu.memory_space<vmem>>, vector<1x1x16x16xbf16>
    %40 = vector.shape_cast %39 : vector<1x1x16x16xbf16> to vector<16x16xbf16>
    %41 = vector.shape_cast %38 : vector<16x16xbf16> to vector<1x1x16x16xbf16>
    tpu.vector_store %arg7[%c0_36, %c1_37, %c0_38, %c0_39], %41 {strides = array<i32>} : memref<1x4x16x16xbf16, #tpu.memory_space<vmem>>, vector<1x1x16x16xbf16>,
    %42 = arith.truncf %37 : vector<16x16xf32> to vector<16x16xbf16>
    %c0_40 = arith.constant 0 : index
    %c1_41 = arith.constant 1 : index
    %c0_42 = arith.constant 0 : index
    %c0_43 = arith.constant 0 : index
    %43 = vector.load %arg8[%c0_40, %c1_41, %c0_42, %c0_43] : memref<1x4x16x16xbf16, #tpu.memory_space<vmem>>, vector<1x1x16x16xbf16>
    %44 = vector.shape_cast %43 : vector<1x1x16x16xbf16> to vector<16x16xbf16>
    %45 = vector.shape_cast %42 : vector<16x16xbf16> to vector<1x1x16x16xbf16>
    tpu.vector_store %arg8[%c0_40, %c1_41, %c0_42, %c0_43], %45 {strides = array<i32>} : memref<1x4x16x16xbf16, #tpu.memory_space<vmem>>, vector<1x1x16x16xbf16>,
    %c2 = arith.constant 2 : index
    %c0_44 = arith.constant 0 : index
    %c0_45 = arith.constant 0 : index
    %46 = vector.load %arg3[%c2, %c0_44, %c0_45] : memref<4x32x16xbf16, #tpu.memory_space<vmem>>, vector<1x32x16xbf16>
    %47 = vector.shape_cast %46 : vector<1x32x16xbf16> to vector<32x16xbf16>
    %cst_46 = arith.constant dense<0.000000e+00> : vector<16x16xf32>
    %48 = tpu.matmul %1, %47, %cst_46 {dimension_numbers = #tpu.dot_dimension_numbers<[1], [0], [0], [1], [0, 0, 1, 1], [], []>} : vector<16x32xbf16>, vector<32x16xbf16>, vector<16x16xf32> -> vector<16x16xf32>
    %c2_47 = arith.constant 2 : index
    %c0_48 = arith.constant 0 : index
    %c0_49 = arith.constant 0 : index
    %49 = vector.load %arg4[%c2_47, %c0_48, %c0_49] : memref<4x1x16xf32, #tpu.memory_space<vmem>>, vector<1x1x16xf32>
    %50 = vector.shape_cast %49 : vector<1x1x16xf32> to vector<1x16xf32>
    %51 = vector.broadcast %50 : vector<1x16xf32> to vector<16x16xf32>
    %52 = arith.addf %48, %51 : vector<16x16xf32>
    %c2_50 = arith.constant 2 : index
    %c0_51 = arith.constant 0 : index
    %c0_52 = arith.constant 0 : index
    %53 = vector.load %arg5[%c2_50, %c0_51, %c0_52] : memref<4x32x16xbf16, #tpu.memory_space<vmem>>, vector<1x32x16xbf16>
    %54 = vector.shape_cast %53 : vector<1x32x16xbf16> to vector<32x16xbf16>
    %cst_53 = arith.constant dense<0.000000e+00> : vector<16x16xf32>
    %55 = tpu.matmul %1, %54, %cst_53 {dimension_numbers = #tpu.dot_dimension_numbers<[1], [0], [0], [1], [0, 0, 1, 1], [], []>} : vector<16x32xbf16>, vector<32x16xbf16>, vector<16x16xf32> -> vector<16x16xf32>
    %c2_54 = arith.constant 2 : index
    %c0_55 = arith.constant 0 : index
    %c0_56 = arith.constant 0 : index
    %56 = vector.load %arg6[%c2_54, %c0_55, %c0_56] : memref<4x1x16xf32, #tpu.memory_space<vmem>>, vector<1x1x16xf32>
    %57 = vector.shape_cast %56 : vector<1x1x16xf32> to vector<1x16xf32>
    %58 = vector.broadcast %57 : vector<1x16xf32> to vector<16x16xf32>
    %59 = arith.addf %55, %58 : vector<16x16xf32>
    %60 = arith.truncf %52 : vector<16x16xf32> to vector<16x16xbf16>
    %c0_57 = arith.constant 0 : index
    %c2_58 = arith.constant 2 : index
    %c0_59 = arith.constant 0 : index
    %c0_60 = arith.constant 0 : index
    %61 = vector.load %arg7[%c0_57, %c2_58, %c0_59, %c0_60] : memref<1x4x16x16xbf16, #tpu.memory_space<vmem>>, vector<1x1x16x16xbf16>
    %62 = vector.shape_cast %61 : vector<1x1x16x16xbf16> to vector<16x16xbf16>
    %63 = vector.shape_cast %60 : vector<16x16xbf16> to vector<1x1x16x16xbf16>
    tpu.vector_store %arg7[%c0_57, %c2_58, %c0_59, %c0_60], %63 {strides = array<i32>} : memref<1x4x16x16xbf16, #tpu.memory_space<vmem>>, vector<1x1x16x16xbf16>,
    %64 = arith.truncf %59 : vector<16x16xf32> to vector<16x16xbf16>
    %c0_61 = arith.constant 0 : index
    %c2_62 = arith.constant 2 : index
    %c0_63 = arith.constant 0 : index
    %c0_64 = arith.constant 0 : index
    %65 = vector.load %arg8[%c0_61, %c2_62, %c0_63, %c0_64] : memref<1x4x16x16xbf16, #tpu.memory_space<vmem>>, vector<1x1x16x16xbf16>
    %66 = vector.shape_cast %65 : vector<1x1x16x16xbf16> to vector<16x16xbf16>
    %67 = vector.shape_cast %64 : vector<16x16xbf16> to vector<1x1x16x16xbf16>
    tpu.vector_store %arg8[%c0_61, %c2_62, %c0_63, %c0_64], %67 {strides = array<i32>} : memref<1x4x16x16xbf16, #tpu.memory_space<vmem>>, vector<1x1x16x16xbf16>,
    %c3 = arith.constant 3 : index
    %c0_65 = arith.constant 0 : index
    %c0_66 = arith.constant 0 : index
    %68 = vector.load %arg3[%c3, %c0_65, %c0_66] : memref<4x32x16xbf16, #tpu.memory_space<vmem>>, vector<1x32x16xbf16>
    %69 = vector.shape_cast %68 : vector<1x32x16xbf16> to vector<32x16xbf16>
    %cst_67 = arith.constant dense<0.000000e+00> : vector<16x16xf32>
    %70 = tpu.matmul %1, %69, %cst_67 {dimension_numbers = #tpu.dot_dimension_numbers<[1], [0], [0], [1], [0, 0, 1, 1], [], []>} : vector<16x32xbf16>, vector<32x16xbf16>, vector<16x16xf32> -> vector<16x16xf32>
    %c3_68 = arith.constant 3 : index
    %c0_69 = arith.constant 0 : index
    %c0_70 = arith.constant 0 : index
    %71 = vector.load %arg4[%c3_68, %c0_69, %c0_70] : memref<4x1x16xf32, #tpu.memory_space<vmem>>, vector<1x1x16xf32>
    %72 = vector.shape_cast %71 : vector<1x1x16xf32> to vector<1x16xf32>
    %73 = vector.broadcast %72 : vector<1x16xf32> to vector<16x16xf32>
    %74 = arith.addf %70, %73 : vector<16x16xf32>
    %c3_71 = arith.constant 3 : index
    %c0_72 = arith.constant 0 : index
    %c0_73 = arith.constant 0 : index
    %75 = vector.load %arg5[%c3_71, %c0_72, %c0_73] : memref<4x32x16xbf16, #tpu.memory_space<vmem>>, vector<1x32x16xbf16>
    %76 = vector.shape_cast %75 : vector<1x32x16xbf16> to vector<32x16xbf16>
    %cst_74 = arith.constant dense<0.000000e+00> : vector<16x16xf32>
    %77 = tpu.matmul %1, %76, %cst_74 {dimension_numbers = #tpu.dot_dimension_numbers<[1], [0], [0], [1], [0, 0, 1, 1], [], []>} : vector<16x32xbf16>, vector<32x16xbf16>, vector<16x16xf32> -> vector<16x16xf32>
    %c3_75 = arith.constant 3 : index
    %c0_76 = arith.constant 0 : index
    %c0_77 = arith.constant 0 : index
    %78 = vector.load %arg6[%c3_75, %c0_76, %c0_77] : memref<4x1x16xf32, #tpu.memory_space<vmem>>, vector<1x1x16xf32>
    %79 = vector.shape_cast %78 : vector<1x1x16xf32> to vector<1x16xf32>
    %80 = vector.broadcast %79 : vector<1x16xf32> to vector<16x16xf32>
    %81 = arith.addf %77, %80 : vector<16x16xf32>
    %82 = arith.truncf %74 : vector<16x16xf32> to vector<16x16xbf16>
    %c0_78 = arith.constant 0 : index
    %c3_79 = arith.constant 3 : index
    %c0_80 = arith.constant 0 : index
    %c0_81 = arith.constant 0 : index
    %83 = vector.load %arg7[%c0_78, %c3_79, %c0_80, %c0_81] : memref<1x4x16x16xbf16, #tpu.memory_space<vmem>>, vector<1x1x16x16xbf16>
    %84 = vector.shape_cast %83 : vector<1x1x16x16xbf16> to vector<16x16xbf16>
    %85 = vector.shape_cast %82 : vector<16x16xbf16> to vector<1x1x16x16xbf16>
    tpu.vector_store %arg7[%c0_78, %c3_79, %c0_80, %c0_81], %85 {strides = array<i32>} : memref<1x4x16x16xbf16, #tpu.memory_space<vmem>>, vector<1x1x16x16xbf16>,
    %86 = arith.truncf %81 : vector<16x16xf32> to vector<16x16xbf16>
    %c0_82 = arith.constant 0 : index
    %c3_83 = arith.constant 3 : index
    %c0_84 = arith.constant 0 : index
    %c0_85 = arith.constant 0 : index
    %87 = vector.load %arg8[%c0_82, %c3_83, %c0_84, %c0_85] : memref<1x4x16x16xbf16, #tpu.memory_space<vmem>>, vector<1x1x16x16xbf16>
    %88 = vector.shape_cast %87 : vector<1x1x16x16xbf16> to vector<16x16xbf16>
    %89 = vector.shape_cast %86 : vector<16x16xbf16> to vector<1x1x16x16xbf16>
    tpu.vector_store %arg8[%c0_82, %c3_83, %c0_84, %c0_85], %89 {strides = array<i32>} : memref<1x4x16x16xbf16, #tpu.memory_space<vmem>>, vector<1x1x16x16xbf16>,
    return
  }
  func.func @transform_0(%arg0: i32, %arg1: i32) -> (i32, i32, i32) {
    %c0_i32 = arith.constant 0 : i32
    %c0_i32_0 = arith.constant 0 : i32
    return %arg0, %arg1, %c0_i32 : i32, i32, i32
  }
  func.func @transform_1(%arg0: i32, %arg1: i32) -> (i32, i32, i32) {
    %c0_i32 = arith.constant 0 : i32
    %c0_i32_0 = arith.constant 0 : i32
    %c0_i32_1 = arith.constant 0 : i32
    %c0_i32_2 = arith.constant 0 : i32
    return %c0_i32, %c0_i32_0, %c0_i32_1 : i32, i32, i32
  }
  func.func @transform_2(%arg0: i32, %arg1: i32) -> (i32, i32, i32) {
    %c0_i32 = arith.constant 0 : i32
    %c0_i32_0 = arith.constant 0 : i32
    %c0_i32_1 = arith.constant 0 : i32
    %c0_i32_2 = arith.constant 0 : i32
    return %c0_i32, %c0_i32_0, %c0_i32_1 : i32, i32, i32
  }
  func.func @transform_3(%arg0: i32, %arg1: i32) -> (i32, i32, i32) {
    %c0_i32 = arith.constant 0 : i32
    %c0_i32_0 = arith.constant 0 : i32
    %c0_i32_1 = arith.constant 0 : i32
    %c0_i32_2 = arith.constant 0 : i32
    return %c0_i32, %c0_i32_0, %c0_i32_1 : i32, i32, i32
  }
  func.func @transform_4(%arg0: i32, %arg1: i32) -> (i32, i32, i32) {
    %c0_i32 = arith.constant 0 : i32
    %c0_i32_0 = arith.constant 0 : i32
    %c0_i32_1 = arith.constant 0 : i32
    %c0_i32_2 = arith.constant 0 : i32
    return %c0_i32, %c0_i32_0, %c0_i32_1 : i32, i32, i32
  }
  func.func @transform_5(%arg0: i32, %arg1: i32) -> (i32, i32, i32, i32) {
    %c0_i32 = arith.constant 0 : i32
    %c0_i32_0 = arith.constant 0 : i32
    %c0_i32_1 = arith.constant 0 : i32
    return %arg0, %c0_i32, %arg1, %c0_i32_0 : i32, i32, i32, i32
  }
  func.func @transform_6(%arg0: i32, %arg1: i32) -> (i32, i32, i32, i32) {
    %c0_i32 = arith.constant 0 : i32
    %c0_i32_0 = arith.constant 0 : i32
    %c0_i32_1 = arith.constant 0 : i32
    return %arg0, %c0_i32, %arg1, %c0_i32_0 : i32, i32, i32, i32
  }
}

</mosaic_0001>

<llo_original>
// kernel: tpu_custom_call.1
$region0: #{tpu_custom_call.1}
  #allocation0 [shape = 'u32[]', space=smem, size = 0x4, offset = 0x4, fixed_abs, tag = 'smem constant byte address 0x4 - core index']
  #allocation1 [shape = 'u32[72,128]{1,0:T(1,128)}', space=vmem, size = 0x9000, scoped, tag = 'internal scratch']
  %s0 = inlined_call_operand.vmem [shape: bf16[2,16,32], index: 0, kind: input, shape index: {}]
  %s1 = inlined_call_operand.vmem [shape: bf16[4,32,16], index: 1, kind: input, shape index: {}]
  %s2 = inlined_call_operand.vmem [shape: f32[4,1,16], index: 2, kind: input, shape index: {}]
  %s3 = inlined_call_operand.vmem [shape: bf16[4,32,16], index: 3, kind: input, shape index: {}]
  %s4 = inlined_call_operand.vmem [shape: f32[4,1,16], index: 4, kind: input, shape index: {}]
  %s5 = inlined_call_operand.hbm [shape: bf16[2,4,16,16], index: 5, kind: output, shape index: {0}]
  %s6 = inlined_call_operand.hbm [shape: bf16[2,4,16,16], index: 6, kind: output, shape index: {1}]
  %7 = xla_tuple %s5, %s6
  %s8 = sld [smem:[#allocation0]]
  $region61: #{tpu_custom_call.1} parent=0
    _
  %s10 = ssub.s32 1, %s8
  %s11 = scalar_select 0, %s10, %s8
  $region1: #{tpu_custom_call.1} parent=0
    #allocation2 [shape = 'u8[32768]{0}', space=vmem, size = 0x8000, scoped, tag = 'output window, operand 0']
    #allocation3 [shape = 's32[2]{0}', space=sflag, size = 0x8, scoped, tag = 'scoped memory for tpu_custom_call.1']
    #allocation4 [shape = 'u8[32768]{0}', space=vmem, size = 0x8000, scoped, tag = 'output window, operand 1']
    #allocation5 [shape = 's32[2]{0}', space=sflag, size = 0x8, scoped, tag = 'scoped memory for tpu_custom_call.1']
    %12 = vsyncpa [#allocation3], 0
    %s13 = scalar_lea.sflag [#allocation3], 1
    %14 = vsyncpa %s13, 0
    %15 = vsyncpa [#allocation5], 0
    %s16 = scalar_lea.sflag [#allocation5], 1
    %17 = vsyncpa %s16, 0
    loop: start=0, step=1, limit=4
    $region2: #{tpu_custom_call.1} parent=1 // loop_pre_header
      _
    $region3: #{tpu_custom_call.1} parent=1 // loop_header
      %s19 = sphi 0, %s23
      %p20 = scmp.ge.s32.totalorder %s19, 4
      %s26 = sphi 0, %s38
      %s27 = sphi 0, %s34
      %s28 = sphi 0, %s26
      %s29 = sphi 0, %s27
      %s30 = sphi 0, %s28
      %s31 = sphi 0, %s29
      %s43 = sphi 0, %s45
      %s46 = sphi 0, %s43
      %s47 = sphi 0, %s46
      %s63 = sphi 0, %s47
      %s67 = sphi 0, %s67
      %s69 = sphi 0, %s67
      %s70 = sphi 0, %s69
      %s84 = sphi 0, %s70
      %s88 = sphi 0, %s88
      %s90 = sphi 0, %s88
      %s91 = sphi 0, %s90
      %s105 = sphi 0, %s91
      %s109 = sphi 0, %s109
      %s111 = sphi 0, %s109
      %s112 = sphi 0, %s111
      %s126 = sphi 0, %s112
      %s130 = sphi 0, %s130
      %s132 = sphi 0, %s130
      %s133 = sphi 0, %s132
      %s147 = sphi 0, %s133
      %s155 = sphi 0, %s157
      %s158 = sphi 0, %s155
      %s159 = sphi 0, %s158
      %s175 = sphi 0, %s159
      %s183 = sphi 0, %s185
      %s186 = sphi 0, %s183
      %s187 = sphi 0, %s186
      %s203 = sphi 0, %s187
    $region4: #{tpu_custom_call.1} parent=1 // loop_header_branch
      %22 = sbr.rel (%p20) target = $region8
    $region5: #{tpu_custom_call.1} parent=1 // loop_body
      %s24 = ssub.s32 %s19, 1
      %s25 = ssub.s32 %s19, 2
      %s32 = sadd.s32 1, %s27
      %p33 = scmp.ge.s32.totalorder %s32, 1
      %s34 = scalar_select %p33, 0, %s32
      %s35 = sadd.s32 1, %s26
      %s36 = scalar_select %p33, %s35, %s26
      %p37 = scmp.ge.s32.totalorder %s36, 2
      %s38 = scalar_select %p37, 0, %s36
      %s39 = ssub.s32 %s26, %s38
      %s40 = ssub.s32 %s27, %s34
      %s41 = sor.u32 %s39, %s40
      %p42 = scmp.eq.s32.totalorder %s41, 0
      %s44 = sadd.s32 %s43, 1
      %s45 = scalar_select %p42, %s43, %s44
      %p48 = pneg %p42
      %p49 = scmp.eq.s32.totalorder %s19, 1
      %p50 = por %p48, %p49
      %p51 = scmp.ne.s32.totalorder %s43, %s46
      %p52 = scmp.eq.s32.totalorder %s19, 0
      %p53 = por %p51, %p52
      %p54 = scmp.ne.s32.totalorder %s43, %s46
      %p55 = scmp.eq.s32.totalorder %s24, 1
      %p56 = por %p54, %p55
      %p57 = scmp.ne.s32.totalorder %s46, %s47
      %p58 = scmp.eq.s32.totalorder %s24, 0
      %p59 = por %p57, %p58
      %p60 = scmp.ne.s32.totalorder %s46, %s47
      %p61 = scmp.eq.s32.totalorder %s25, 1
      %p62 = por %p60, %p61
      %p64 = scmp.ne.s32.totalorder %s47, %s63
      %p65 = scmp.eq.s32.totalorder %s25, 0
      %p66 = por %p64, %p65
      %s68 = sadd.s32 %s67, 1
      %p71 = scmp.eq.s32.totalorder %s19, 1
      %p72 = scmp.ne.s32.totalorder %s67, %s69
      %p73 = scmp.eq.s32.totalorder %s19, 0
      %p74 = por %p72, %p73
      %p75 = scmp.ne.s32.totalorder %s67, %s69
      %p76 = scmp.eq.s32.totalorder %s24, 1
      %p77 = por %p75, %p76
      %p78 = scmp.ne.s32.totalorder %s69, %s70
      %p79 = scmp.eq.s32.totalorder %s24, 0
      %p80 = por %p78, %p79
      %p81 = scmp.ne.s32.totalorder %s69, %s70
      %p82 = scmp.eq.s32.totalorder %s25, 1
      %p83 = por %p81, %p82
      %p85 = scmp.ne.s32.totalorder %s70, %s84
      %p86 = scmp.eq.s32.totalorder %s25, 0
      %p87 = por %p85, %p86
      %s89 = sadd.s32 %s88, 1
      %p92 = scmp.eq.s32.totalorder %s19, 1
      %p93 = scmp.ne.s32.totalorder %s88, %s90
      %p94 = scmp.eq.s32.totalorder %s19, 0
      %p95 = por %p93, %p94
      %p96 = scmp.ne.s32.totalorder %s88, %s90
      %p97 = scmp.eq.s32.totalorder %s24, 1
      %p98 = por %p96, %p97
      %p99 = scmp.ne.s32.totalorder %s90, %s91
      %p100 = scmp.eq.s32.totalorder %s24, 0
      %p101 = por %p99, %p100
      %p102 = scmp.ne.s32.totalorder %s90, %s91
      %p103 = scmp.eq.s32.totalorder %s25, 1
      %p104 = por %p102, %p103
      %p106 = scmp.ne.s32.totalorder %s91, %s105
      %p107 = scmp.eq.s32.totalorder %s25, 0
      %p108 = por %p106, %p107
      %s110 = sadd.s32 %s109, 1
      %p113 = scmp.eq.s32.totalorder %s19, 1
      %p114 = scmp.ne.s32.totalorder %s109, %s111
      %p115 = scmp.eq.s32.totalorder %s19, 0
      %p116 = por %p114, %p115
      %p117 = scmp.ne.s32.totalorder %s109, %s111
      %p118 = scmp.eq.s32.totalorder %s24, 1
      %p119 = por %p117, %p118
      %p120 = scmp.ne.s32.totalorder %s111, %s112
      %p121 = scmp.eq.s32.totalorder %s24, 0
      %p122 = por %p120, %p121
      %p123 = scmp.ne.s32.totalorder %s111, %s112
      %p124 = scmp.eq.s32.totalorder %s25, 1
      %p125 = por %p123, %p124
      %p127 = scmp.ne.s32.totalorder %s112, %s126
      %p128 = scmp.eq.s32.totalorder %s25, 0
      %p129 = por %p127, %p128
      %s131 = sadd.s32 %s130, 1
      %p134 = scmp.eq.s32.totalorder %s19, 1
      %p135 = scmp.ne.s32.totalorder %s130, %s132
      %p136 = scmp.eq.s32.totalorder %s19, 0
      %p137 = por %p135, %p136
      %p138 = scmp.ne.s32.totalorder %s130, %s132
      %p139 = scmp.eq.s32.totalorder %s24, 1
      %p140 = por %p138, %p139
      %p141 = scmp.ne.s32.totalorder %s132, %s133
      %p142 = scmp.eq.s32.totalorder %s24, 0
      %p143 = por %p141, %p142
      %p144 = scmp.ne.s32.totalorder %s132, %s133
      %p145 = scmp.eq.s32.totalorder %s25, 1
      %p146 = por %p144, %p145
      %p148 = scmp.ne.s32.totalorder %s133, %s147
      %p149 = scmp.eq.s32.totalorder %s25, 0
      %p150 = por %p148, %p149
      %s151 = ssub.s32 %s26, %s38
      %s152 = ssub.s32 %s27, %s34
      %s153 = sor.u32 %s151, %s152
      %p154 = scmp.eq.s32.totalorder %s153, 0
      %s156 = sadd.s32 %s155, 1
      %s157 = scalar_select %p154, %s155, %s156
      %p160 = pneg %p154
      %p161 = scmp.eq.s32.totalorder %s19, 1
      %p162 = por %p160, %p161
      %p163 = scmp.ne.s32.totalorder %s155, %s158
      %p164 = scmp.eq.s32.totalorder %s19, 0
      %p165 = por %p163, %p164
      %p166 = scmp.ne.s32.totalorder %s155, %s158
      %p167 = scmp.eq.s32.totalorder %s24, 1
      %p168 = por %p166, %p167
      %p169 = scmp.ne.s32.totalorder %s158, %s159
      %p170 = scmp.eq.s32.totalorder %s24, 0
      %p171 = por %p169, %p170
      %p172 = scmp.ne.s32.totalorder %s158, %s159
      %p173 = scmp.eq.s32.totalorder %s25, 1
      %p174 = por %p172, %p173
      %p176 = scmp.ne.s32.totalorder %s159, %s175
      %p177 = scmp.eq.s32.totalorder %s25, 0
      %p178 = por %p176, %p177
      %s179 = ssub.s32 %s26, %s38
      %s180 = ssub.s32 %s27, %s34
      %s181 = sor.u32 %s179, %s180
      %p182 = scmp.eq.s32.totalorder %s181, 0
      %s184 = sadd.s32 %s183, 1
      %s185 = scalar_select %p182, %s183, %s184
      %p188 = pneg %p182
      %p189 = scmp.eq.s32.totalorder %s19, 1
      %p190 = por %p188, %p189
      %p191 = scmp.ne.s32.totalorder %s183, %s186
      %p192 = scmp.eq.s32.totalorder %s19, 0
      %p193 = por %p191, %p192
      %p194 = scmp.ne.s32.totalorder %s183, %s186
      %p195 = scmp.eq.s32.totalorder %s24, 1
      %p196 = por %p194, %p195
      %p197 = scmp.ne.s32.totalorder %s186, %s187
      %p198 = scmp.eq.s32.totalorder %s24, 0
      %p199 = por %p197, %p198
      %p200 = scmp.ne.s32.totalorder %s186, %s187
      %p201 = scmp.eq.s32.totalorder %s25, 1
      %p202 = por %p200, %p201
      %p204 = scmp.ne.s32.totalorder %s187, %s203
      %p205 = scmp.eq.s32.totalorder %s25, 0
      %p206 = por %p204, %p205
      %p207 = scmp.le.s32.totalorder 1, %s19
      %p208 = scmp.lt.s32.totalorder %s19, 3
      %p209 = pnand %p207, %p208
      %p210 = pneg %p209
      // Predicated region
      $region9: #{tpu_custom_call.1} parent=5 // pred_check
        _
      $region10: #{tpu_custom_call.1} parent=5 // pred_check_branch
        %212 = sbr.rel (%p209) target = $region12
      $region11: #{tpu_custom_call.1} parent=5 // pred_region
        %s213 = ssub.s32 %s19, 1
        // Predicated region
        $region13: #{tpu_custom_call.1} parent=11 // pred_check
          %p214 = pneg %p80
        $region14: #{tpu_custom_call.1} parent=11 // pred_check_branch
          %216 = sbr.rel (%p214) target = $region16
        $region15: #{tpu_custom_call.1} parent=11 // pred_region
          _
        $region16: #{tpu_custom_call.1} parent=11 // pred_fallthru
          _
        // Predicated region
        $region17: #{tpu_custom_call.1} parent=11 // pred_check
          %p217 = pneg %p101
        $region18: #{tpu_custom_call.1} parent=11 // pred_check_branch
          %219 = sbr.rel (%p217) target = $region20
        $region19: #{tpu_custom_call.1} parent=11 // pred_region
          _
        $region20: #{tpu_custom_call.1} parent=11 // pred_fallthru
          _
        // Predicated region
        $region21: #{tpu_custom_call.1} parent=11 // pred_check
          %p220 = pneg %p122
        $region22: #{tpu_custom_call.1} parent=11 // pred_check_branch
          %222 = sbr.rel (%p220) target = $region24
        $region23: #{tpu_custom_call.1} parent=11 // pred_region
          _
        $region24: #{tpu_custom_call.1} parent=11 // pred_fallthru
          _
        // Predicated region
        $region25: #{tpu_custom_call.1} parent=11 // pred_check
          %p223 = pneg %p143
        $region26: #{tpu_custom_call.1} parent=11 // pred_check_branch
          %225 = sbr.rel (%p223) target = $region28
        $region27: #{tpu_custom_call.1} parent=11 // pred_region
          _
        $region28: #{tpu_custom_call.1} parent=11 // pred_fallthru
          _
      $region12: #{tpu_custom_call.1} parent=5 // pred_fallthru
        _
      %p226 = scmp.lt.s32.totalorder %s19, 2
      // Predicated region
      $region29: #{tpu_custom_call.1} parent=5 // pred_check
        %p227 = pneg %p226
      $region30: #{tpu_custom_call.1} parent=5 // pred_check_branch
        %229 = sbr.rel (%p227) target = $region32
      $region31: #{tpu_custom_call.1} parent=5 // pred_region
        // Predicated region
        $region33: #{tpu_custom_call.1} parent=31 // pred_check
          %p230 = pneg %p53
        $region34: #{tpu_custom_call.1} parent=31 // pred_check_branch
          %232 = sbr.rel (%p230) target = $region36
        $region35: #{tpu_custom_call.1} parent=31 // pred_region
          %s233 = smul.u32 2, %s27
          %p234 = scmp.lt.s32.totalorder %s26, 1
          %s235 = scalar_select %p234, %s26, 1
          %p236 = scmp.lt.s32.totalorder %s233, 1
          %s237 = scalar_select %p236, %s233, 1
          %s238 = smul.addr %s235, 2
          %s239 = sadd.s32 %s237, %s238
          %s240 = smul.addr %s239, 4
          %s241 = scalar_lea.vmem %s0, %s240
          %s242 = smul.u32 2, %s27
        $region36: #{tpu_custom_call.1} parent=31 // pred_fallthru
          _
      $region32: #{tpu_custom_call.1} parent=5 // pred_fallthru
        _
      %p243 = scmp.le.s32.totalorder 1, %s19
      %p244 = scmp.lt.s32.totalorder %s19, 3
      %p245 = pnand %p243, %p244
      %p246 = pneg %p245
      // Predicated region
      $region37: #{tpu_custom_call.1} parent=5 // pred_check
        _
      $region38: #{tpu_custom_call.1} parent=5 // pred_check_branch
        %248 = sbr.rel (%p245) target = $region40
      $region39: #{tpu_custom_call.1} parent=5 // pred_region
        %s249 = ssub.s32 %s19, 1
        %s250 = smul.u32 2, %s29
        %p251 = scmp.lt.s32.totalorder %s28, 1
        %s252 = scalar_select %p251, %s28, 1
        %p253 = scmp.lt.s32.totalorder %s250, 1
        %s254 = scalar_select %p253, %s250, 1
        %s255 = smul.addr %s252, 2
        %s256 = sadd.s32 %s254, %s255
        %s257 = smul.addr %s256, 4
        %s258 = scalar_lea.vmem %s0, %s257
        %p259 = pneg %p59
        %p260 = pneg %p56
        %p261 = pneg %p80
        %p262 = pneg %p77
        %p263 = pneg %p101
        %p264 = pneg %p98
        %p265 = pneg %p122
        %p266 = pneg %p119
        %p267 = pneg %p143
        %p268 = pneg %p140
        %p269 = pneg %p171
        %p270 = pneg %p168
        %s271 = sand.u32 %s158, 1
        %s272 = scalar_lea.sflag [#allocation3], %s271
        %s273 = sand.u32 %s158, 1
        %s274 = smul.addr %s273, 32
        %s275 = scalar_lea.vmem [#allocation2], %s274
        %p276 = pneg %p199
        %p277 = pneg %p196
        %s278 = sand.u32 %s186, 1
        %s279 = scalar_lea.sflag [#allocation5], %s278
        %s280 = sand.u32 %s186, 1
        %s281 = smul.addr %s280, 32
        %s282 = scalar_lea.vmem [#allocation4], %s281
        %s283 = smul.u32 2, %s29
        %p284 = scmp.lt.s32.totalorder %s28, 1
        %s285 = scalar_select %p284, %s28, 1
        %p286 = scmp.lt.s32.totalorder %s283, 1
        %s287 = scalar_select %p286, %s283, 1
        %s288 = smul.addr %s285, 2
        %s289 = sadd.s32 %s287, %s288
        %s290 = smul.addr %s289, 4
        %s291 = scalar_lea.vmem %s0, %s290
        %s292 = smul.u32 2, %s29
        %s293 = smul.u32 2, %s29
        %s294 = smul.u32 2, %s29
        %v296 = vld [vmem:[%s291] sm:$0xf]
        %v297 = vld [vmem:[%s291 + $0x4] sm:$0xf]
        %v298 = vld [vmem:[%s1] sm:$0xf]
        %v299 = vld [vmem:[%s1 + $0x4] sm:$0xf]
        %v300 = vld [vmem:[%s1 + $0x8] sm:$0xf]
        %v301 = vld [vmem:[%s1 + $0xc] sm:$0xf]
        %v302 = vld [vmem:[%s2] sm:$0x1]
        %v304 = vperm.slane %v302, 0
        %v308 = vunpack.c.l.b16 %v296
        %v309 = vunpack.c.l.b16 %v297
        %v310 = vpack.c.b16 %v309, %v308
        %v315 = vunpack.c.l.b16 %v298
        %v316 = vunpack.c.l.b16 %v299
        %v317 = vunpack.c.l.b16 %v300
        %v318 = vunpack.c.l.b16 %v301
        %v319 = vpack.c.b16 %v316, %v315
        %v320 = vpack.c.b16 %v318, %v317
        %vm323 = vcmask 261120
        %v325 = vsel %vm323, %v310, 0
        %327 = vmatpush.bf16.msra.mxu0 0
        %328 = vmatpush.bf16.msra.mxu0 0
        %329 = vmatpush.bf16.msra.mxu0 0
        %330 = vmatpush.bf16.msra.mxu0 0
        %331 = vmatpush.bf16.msra.mxu0 0
        %332 = vmatpush.bf16.msra.mxu0 0
        %333 = vmatpush.bf16.msra.mxu0 %v320
        %334 = vmatpush.bf16.msra.mxu0 %v319
        %335 = vmatmul.bf16.gmra.mxu0 %v325
        %v336 = vpop.f32.mrf.mxu0
        %v337 = vadd.f32 %v304, %v336
        %v338 = vpop.f32.mrf.mxu0
        %v339 = vadd.f32 %v304, %v338
        %340 = vdwg.mxu0
        %v341 = vld [vmem:[%s3] sm:$0xf]
        %v342 = vld [vmem:[%s3 + $0x4] sm:$0xf]
        %v343 = vld [vmem:[%s3 + $0x8] sm:$0xf]
        %v344 = vld [vmem:[%s3 + $0xc] sm:$0xf]
        %v345 = vld [vmem:[%s4] sm:$0x1]
        %v347 = vperm.slane %v345, 0
        %v353 = vunpack.c.l.b16 %v341
        %v354 = vunpack.c.l.b16 %v342
        %v355 = vunpack.c.l.b16 %v343
        %v356 = vunpack.c.l.b16 %v344
        %v357 = vpack.c.b16 %v354, %v353
        %v358 = vpack.c.b16 %v356, %v355
        %361 = vmatpush.bf16.msra.mxu0 0
        %362 = vmatpush.bf16.msra.mxu0 0
        %363 = vmatpush.bf16.msra.mxu0 0
        %364 = vmatpush.bf16.msra.mxu0 0
        %365 = vmatpush.bf16.msra.mxu0 0
        %366 = vmatpush.bf16.msra.mxu0 0
        %367 = vmatpush.bf16.msra.mxu0 %v358
        %368 = vmatpush.bf16.msra.mxu0 %v357
        %369 = vmatmul.bf16.gmra.mxu0 %v325
        %v370 = vpop.f32.mrf.mxu0
        %v371 = vadd.f32 %v347, %v370
        %v372 = vpop.f32.mrf.mxu0
        %v373 = vadd.f32 %v347, %v372
        %374 = vdwg.mxu0
        %v375 = vpack.c.bf16 %v337, %v337
        %v376 = vpack.c.bf16 %v339, %v339
        %vm377 = vcmask 125952
        %378 = vst.msk [vmem:[%s275] sm:$0xf] %vm377, %v375
        %379 = vst.msk [vmem:[%s275 + $0x4] sm:$0xf] %vm377, %v376
        %v380 = vpack.c.bf16 %v371, %v371
        %v381 = vpack.c.bf16 %v373, %v373
        %382 = vst.msk [vmem:[%s282] sm:$0xf] %vm377, %v380
        %383 = vst.msk [vmem:[%s282 + $0x4] sm:$0xf] %vm377, %v381
        %s384 = scalar_lea.vmem %s1, 16
        %v385 = vld [vmem:[%s384] sm:$0xf]
        %v386 = vld [vmem:[%s384 + $0x4] sm:$0xf]
        %v387 = vld [vmem:[%s384 + $0x8] sm:$0xf]
        %v388 = vld [vmem:[%s384 + $0xc] sm:$0xf]
        %s389 = scalar_lea.vmem %s2, 1
        %v390 = vld [vmem:[%s389] sm:$0x1]
        %v392 = vperm.slane %v390, 0
        %v398 = vunpack.c.l.b16 %v385
        %v399 = vunpack.c.l.b16 %v386
        %v400 = vunpack.c.l.b16 %v387
        %v401 = vunpack.c.l.b16 %v388
        %v402 = vpack.c.b16 %v399, %v398
        %v403 = vpack.c.b16 %v401, %v400
        %406 = vmatpush.bf16.msra.mxu0 0
        %407 = vmatpush.bf16.msra.mxu0 0
        %408 = vmatpush.bf16.msra.mxu0 0
        %409 = vmatpush.bf16.msra.mxu0 0
        %410 = vmatpush.bf16.msra.mxu0 0
        %411 = vmatpush.bf16.msra.mxu0 0
        %412 = vmatpush.bf16.msra.mxu0 %v403
        %413 = vmatpush.bf16.msra.mxu0 %v402
        %414 = vmatmul.bf16.gmra.mxu0 %v325
        %v415 = vpop.f32.mrf.mxu0
        %v416 = vadd.f32 %v392, %v415
        %v417 = vpop.f32.mrf.mxu0
        %v418 = vadd.f32 %v392, %v417
        %419 = vdwg.mxu0
        %s420 = scalar_lea.vmem %s3, 16
        %v421 = vld [vmem:[%s420] sm:$0xf]
        %v422 = vld [vmem:[%s420 + $0x4] sm:$0xf]
        %v423 = vld [vmem:[%s420 + $0x8] sm:$0xf]
        %v424 = vld [vmem:[%s420 + $0xc] sm:$0xf]
        %s425 = scalar_lea.vmem %s4, 1
        %v426 = vld [vmem:[%s425] sm:$0x1]
        %v428 = vperm.slane %v426, 0
        %v434 = vunpack.c.l.b16 %v421
        %v435 = vunpack.c.l.b16 %v422
        %v436 = vunpack.c.l.b16 %v423
        %v437 = vunpack.c.l.b16 %v424
        %v438 = vpack.c.b16 %v435, %v434
        %v439 = vpack.c.b16 %v437, %v436
        %442 = vmatpush.bf16.msra.mxu0 0
        %443 = vmatpush.bf16.msra.mxu0 0
        %444 = vmatpush.bf16.msra.mxu0 0
        %445 = vmatpush.bf16.msra.mxu0 0
        %446 = vmatpush.bf16.msra.mxu0 0
        %447 = vmatpush.bf16.msra.mxu0 0
        %448 = vmatpush.bf16.msra.mxu0 %v439
        %449 = vmatpush.bf16.msra.mxu0 %v438
        %450 = vmatmul.bf16.gmra.mxu0 %v325
        %v451 = vpop.f32.mrf.mxu0
        %v452 = vadd.f32 %v428, %v451
        %v453 = vpop.f32.mrf.mxu0
        %v454 = vadd.f32 %v428, %v453
        %455 = vdwg.mxu0
        %v456 = vpack.c.bf16 %v416, %v416
        %v457 = vpack.c.bf16 %v418, %v418
        %s458 = scalar_lea.vmem %s275, 8 [#allocation2]
        %459 = vst.msk [vmem:[%s458] sm:$0xf] %vm377, %v456
        %460 = vst.msk [vmem:[%s458 + $0x4] sm:$0xf] %vm377, %v457
        %v461 = vpack.c.bf16 %v452, %v452
        %v462 = vpack.c.bf16 %v454, %v454
        %s463 = scalar_lea.vmem %s282, 8 [#allocation4]
        %464 = vst.msk [vmem:[%s463] sm:$0xf] %vm377, %v461
        %465 = vst.msk [vmem:[%s463 + $0x4] sm:$0xf] %vm377, %v462
        %s466 = scalar_lea.vmem %s1, 32
        %v467 = vld [vmem:[%s466] sm:$0xf]
        %v468 = vld [vmem:[%s466 + $0x4] sm:$0xf]
        %v469 = vld [vmem:[%s466 + $0x8] sm:$0xf]
        %v470 = vld [vmem:[%s466 + $0xc] sm:$0xf]
        %s471 = scalar_lea.vmem %s2, 2
        %v472 = vld [vmem:[%s471] sm:$0x1]
        %v474 = vperm.slane %v472, 0
        %v480 = vunpack.c.l.b16 %v467
        %v481 = vunpack.c.l.b16 %v468
        %v482 = vunpack.c.l.b16 %v469
        %v483 = vunpack.c.l.b16 %v470
        %v484 = vpack.c.b16 %v481, %v480
        %v485 = vpack.c.b16 %v483, %v482
        %488 = vmatpush.bf16.msra.mxu0 0
        %489 = vmatpush.bf16.msra.mxu0 0
        %490 = vmatpush.bf16.msra.mxu0 0
        %491 = vmatpush.bf16.msra.mxu0 0
        %492 = vmatpush.bf16.msra.mxu0 0
        %493 = vmatpush.bf16.msra.mxu0 0
        %494 = vmatpush.bf16.msra.mxu0 %v485
        %495 = vmatpush.bf16.msra.mxu0 %v484
        %496 = vmatmul.bf16.gmra.mxu0 %v325
        %v497 = vpop.f32.mrf.mxu0
        %v498 = vadd.f32 %v474, %v497
        %v499 = vpop.f32.mrf.mxu0
        %v500 = vadd.f32 %v474, %v499
        %501 = vdwg.mxu0
        %s502 = scalar_lea.vmem %s3, 32
        %v503 = vld [vmem:[%s502] sm:$0xf]
        %v504 = vld [vmem:[%s502 + $0x4] sm:$0xf]
        %v505 = vld [vmem:[%s502 + $0x8] sm:$0xf]
        %v506 = vld [vmem:[%s502 + $0xc] sm:$0xf]
        %s507 = scalar_lea.vmem %s4, 2
        %v508 = vld [vmem:[%s507] sm:$0x1]
        %v510 = vperm.slane %v508, 0
        %v516 = vunpack.c.l.b16 %v503
        %v517 = vunpack.c.l.b16 %v504
        %v518 = vunpack.c.l.b16 %v505
        %v519 = vunpack.c.l.b16 %v506
        %v520 = vpack.c.b16 %v517, %v516
        %v521 = vpack.c.b16 %v519, %v518
        %524 = vmatpush.bf16.msra.mxu0 0
        %525 = vmatpush.bf16.msra.mxu0 0
        %526 = vmatpush.bf16.msra.mxu0 0
        %527 = vmatpush.bf16.msra.mxu0 0
        %528 = vmatpush.bf16.msra.mxu0 0
        %529 = vmatpush.bf16.msra.mxu0 0
        %530 = vmatpush.bf16.msra.mxu0 %v521
        %531 = vmatpush.bf16.msra.mxu0 %v520
        %532 = vmatmul.bf16.gmra.mxu0 %v325
        %v533 = vpop.f32.mrf.mxu0
        %v534 = vadd.f32 %v510, %v533
        %v535 = vpop.f32.mrf.mxu0
        %v536 = vadd.f32 %v510, %v535
        %537 = vdwg.mxu0
        %v538 = vpack.c.bf16 %v498, %v498
        %v539 = vpack.c.bf16 %v500, %v500
        %s540 = scalar_lea.vmem %s275, 16 [#allocation2]
        %541 = vst.msk [vmem:[%s540] sm:$0xf] %vm377, %v538
        %542 = vst.msk [vmem:[%s540 + $0x4] sm:$0xf] %vm377, %v539
        %v543 = vpack.c.bf16 %v534, %v534
        %v544 = vpack.c.bf16 %v536, %v536
        %s545 = scalar_lea.vmem %s282, 16 [#allocation4]
        %546 = vst.msk [vmem:[%s545] sm:$0xf] %vm377, %v543
        %547 = vst.msk [vmem:[%s545 + $0x4] sm:$0xf] %vm377, %v544
        %s548 = scalar_lea.vmem %s1, 48
        %v549 = vld [vmem:[%s548] sm:$0xf]
        %v550 = vld [vmem:[%s548 + $0x4] sm:$0xf]
        %v551 = vld [vmem:[%s548 + $0x8] sm:$0xf]
        %v552 = vld [vmem:[%s548 + $0xc] sm:$0xf]
        %s553 = scalar_lea.vmem %s2, 3
        %v554 = vld [vmem:[%s553] sm:$0x1]
        %v556 = vperm.slane %v554, 0
        %v562 = vunpack.c.l.b16 %v549
        %v563 = vunpack.c.l.b16 %v550
        %v564 = vunpack.c.l.b16 %v551
        %v565 = vunpack.c.l.b16 %v552
        %v566 = vpack.c.b16 %v563, %v562
        %v567 = vpack.c.b16 %v565, %v564
        %570 = vmatpush.bf16.msra.mxu0 0
        %571 = vmatpush.bf16.msra.mxu0 0
        %572 = vmatpush.bf16.msra.mxu0 0
        %573 = vmatpush.bf16.msra.mxu0 0
        %574 = vmatpush.bf16.msra.mxu0 0
        %575 = vmatpush.bf16.msra.mxu0 0
        %576 = vmatpush.bf16.msra.mxu0 %v567
        %577 = vmatpush.bf16.msra.mxu0 %v566
        %578 = vmatmul.bf16.gmra.mxu0 %v325
        %v579 = vpop.f32.mrf.mxu0
        %v580 = vadd.f32 %v556, %v579
        %v581 = vpop.f32.mrf.mxu0
        %v582 = vadd.f32 %v556, %v581
        %583 = vdwg.mxu0
        %s584 = scalar_lea.vmem %s3, 48
        %v585 = vld [vmem:[%s584] sm:$0xf]
        %v586 = vld [vmem:[%s584 + $0x4] sm:$0xf]
        %v587 = vld [vmem:[%s584 + $0x8] sm:$0xf]
        %v588 = vld [vmem:[%s584 + $0xc] sm:$0xf]
        %s589 = scalar_lea.vmem %s4, 3
        %v590 = vld [vmem:[%s589] sm:$0x1]
        %v592 = vperm.slane %v590, 0
        %v598 = vunpack.c.l.b16 %v585
        %v599 = vunpack.c.l.b16 %v586
        %v600 = vunpack.c.l.b16 %v587
        %v601 = vunpack.c.l.b16 %v588
        %v602 = vpack.c.b16 %v599, %v598
        %v603 = vpack.c.b16 %v601, %v600
        %606 = vmatpush.bf16.msra.mxu0 0
        %607 = vmatpush.bf16.msra.mxu0 0
        %608 = vmatpush.bf16.msra.mxu0 0
        %609 = vmatpush.bf16.msra.mxu0 0
        %610 = vmatpush.bf16.msra.mxu0 0
        %611 = vmatpush.bf16.msra.mxu0 0
        %612 = vmatpush.bf16.msra.mxu0 %v603
        %613 = vmatpush.bf16.msra.mxu0 %v602
        %614 = vmatmul.bf16.gmra.mxu0 %v325
        %v615 = vpop.f32.mrf.mxu0
        %v616 = vadd.f32 %v592, %v615
        %v617 = vpop.f32.mrf.mxu0
        %v618 = vadd.f32 %v592, %v617
        %619 = vdwg.mxu0
        %v620 = vpack.c.bf16 %v580, %v580
        %v621 = vpack.c.bf16 %v582, %v582
        %s622 = scalar_lea.vmem %s275, 24 [#allocation2]
        %623 = vst.msk [vmem:[%s622] sm:$0xf] %vm377, %v620
        %624 = vst.msk [vmem:[%s622 + $0x4] sm:$0xf] %vm377, %v621
        %v625 = vpack.c.bf16 %v616, %v616
        %v626 = vpack.c.bf16 %v618, %v618
        %s627 = scalar_lea.vmem %s282, 24 [#allocation4]
        %628 = vst.msk [vmem:[%s627] sm:$0xf] %vm377, %v625
        %629 = vst.msk [vmem:[%s627 + $0x4] sm:$0xf] %vm377, %v626
        %s630 = sand.u32 %s158, 1
        %s631 = scalar_lea.sflag [#allocation3], %s630
        %s632 = sand.u32 %s158, 1
        %s633 = smul.addr %s632, 32
        %s634 = scalar_lea.vmem [#allocation2], %s633
        %s635 = sand.u32 %s186, 1
        %s636 = scalar_lea.sflag [#allocation5], %s635
        %s637 = sand.u32 %s186, 1
        %s638 = smul.addr %s637, 32
        %s639 = scalar_lea.vmem [#allocation4], %s638
        // Predicated region
        $region41: #{tpu_custom_call.1} parent=39 // pred_check
          %p640 = pneg %p168
        $region42: #{tpu_custom_call.1} parent=39 // pred_check_branch
          %642 = sbr.rel (%p640) target = $region44
        $region43: #{tpu_custom_call.1} parent=39 // pred_region
          %s643 = smul.u32 2, %s29
          %645 = vsyncadd %s631, 0
          %s646 = smul.addr %s28, 8
          %s647 = sadd.s32 %s643, %s646
          %s648 = smul.addr %s647, 4
          %s649 = scalar_lea.hbm %s5, %s648
          %s650 = sshll.u32 %s634, 4
          %s651 = int_to_ptr.vmem [resolvable:$true] %s650
          %s652 = sshll.u32 %s649, 4
          %s653 = int_to_ptr.hbm [resolvable:$true] %s652
          %658 = dma.vmem_to_hbm [thread:$0]  %s651, 512, %s653, %s631, 64, 64, 4
        $region44: #{tpu_custom_call.1} parent=39 // pred_fallthru
          _
        // Predicated region
        $region45: #{tpu_custom_call.1} parent=39 // pred_check
          %p659 = pneg %p196
        $region46: #{tpu_custom_call.1} parent=39 // pred_check_branch
          %661 = sbr.rel (%p659) target = $region48
        $region47: #{tpu_custom_call.1} parent=39 // pred_region
          %s662 = smul.u32 2, %s29
          %664 = vsyncadd %s636, 0
          %s665 = smul.addr %s28, 8
          %s666 = sadd.s32 %s662, %s665
          %s667 = smul.addr %s666, 4
          %s668 = scalar_lea.hbm %s6, %s667
          %s669 = sshll.u32 %s639, 4
          %s670 = int_to_ptr.vmem [resolvable:$true] %s669
          %s671 = sshll.u32 %s668, 4
          %s672 = int_to_ptr.hbm [resolvable:$true] %s671
          %677 = dma.vmem_to_hbm [thread:$0]  %s670, 512, %s672, %s636, 64, 64, 4
        $region48: #{tpu_custom_call.1} parent=39 // pred_fallthru
          _
      $region40: #{tpu_custom_call.1} parent=5 // pred_fallthru
        _
      %p678 = scmp.le.s32.totalorder 2, %s19
      // Predicated region
      $region49: #{tpu_custom_call.1} parent=5 // pred_check
        %p679 = pneg %p678
      $region50: #{tpu_custom_call.1} parent=5 // pred_check_branch
        %681 = sbr.rel (%p679) target = $region52
      $region51: #{tpu_custom_call.1} parent=5 // pred_region
        %s682 = ssub.s32 %s19, 2
        // Predicated region
        $region53: #{tpu_custom_call.1} parent=51 // pred_check
          %p683 = pneg %p174
        $region54: #{tpu_custom_call.1} parent=51 // pred_check_branch
          %685 = sbr.rel (%p683) target = $region56
        $region55: #{tpu_custom_call.1} parent=51 // pred_region
          %s686 = sand.u32 %s159, 1
          %s687 = scalar_lea.sflag [#allocation3], %s686
          %s688 = sand.u32 %s159, 1
          %s689 = smul.addr %s688, 32
          %s690 = scalar_lea.vmem [#allocation2], %s689
          %692 = dma.done %s687, 512
        $region56: #{tpu_custom_call.1} parent=51 // pred_fallthru
          _
        // Predicated region
        $region57: #{tpu_custom_call.1} parent=51 // pred_check
          %p693 = pneg %p202
        $region58: #{tpu_custom_call.1} parent=51 // pred_check_branch
          %695 = sbr.rel (%p693) target = $region60
        $region59: #{tpu_custom_call.1} parent=51 // pred_region
          %s696 = sand.u32 %s187, 1
          %s697 = scalar_lea.sflag [#allocation5], %s696
          %s698 = sand.u32 %s187, 1
          %s699 = smul.addr %s698, 32
          %s700 = scalar_lea.vmem [#allocation4], %s699
          %702 = dma.done %s697, 512
        $region60: #{tpu_custom_call.1} parent=51 // pred_fallthru
          _
      $region52: #{tpu_custom_call.1} parent=5 // pred_fallthru
        _
    $region6: #{tpu_custom_call.1} parent=1 // loop_footer
      %s23 = sadd.s32 1, %s19
    $region7: #{tpu_custom_call.1} parent=1 // loop_footer_branch
      %18 = sbr.rel target = $region3
    $region8: #{tpu_custom_call.1} parent=1 // loop_exit
      _
    %703 = vsyncpa [#allocation3], 1
    %s704 = scalar_lea.sflag [#allocation3], 1
    %705 = vsyncpa %s704, 1
    %706 = vsyncpa [#allocation5], 1
    %s707 = scalar_lea.sflag [#allocation5], 1
    %708 = vsyncpa %s707, 1

</llo_original>
